<compile_context>
chip_gen: v6e
topology: v6e:2x2x1
jax: 0.10.0
libtpu: 0.0.40
codegen_flags: <defaults>
</compile_context>

<pallas_src>
import jax
import jax.numpy as jnp
from jax.experimental import pallas as pl
from jax.experimental.pallas import tpu as pltpu


# Heads, in the order of the PyTorch module's return tuple.
HEAD_NAMES = ("disamb", "coref", "brand", "color", "materials", "type", "price",
              "customer_review")
HEAD_SIZES = (2, 2, 12, 9, 7, 10, 10, 19)
TOTAL_HEAD = sum(HEAD_SIZES)          # 71
OUT_PAD = 128                         # lane-dense padded head width (multiple of 128)


def _round_up(x, m):
    return (x + m - 1) // m * m


def _cdiv(a, b):
    return (a + b - 1) // b


def _furniture_head_kernel(x_ref, w_ref, b_ref, out_ref):
    """One batch tile:  out = x @ W_comb + b_comb  (MXU, f32 accumulate, f32 bias)."""
    acc = jnp.dot(x_ref[...], w_ref[...], preferred_element_type=jnp.float32)
    out_ref[...] = (acc + b_ref[...]).astype(out_ref.dtype)


def prepare_weights(params, *, compute_dtype=jnp.bfloat16):
    """Fold aggregator + heads into one padded affine map.  Call ONCE and reuse.

    params: dict of PyTorch-layout (weight (out,in), bias (out,)) pairs keyed by
            "aggregator" and each name in HEAD_NAMES.
    Returns dict with:
      "w": (D2p, 128) compute_dtype folded/padded weight
      "b": (1, 128)   float32 folded/padded bias
    """
    wa_t = params["aggregator"][0].T.astype(jnp.float32)                    # (D2, D2)
    ba = params["aggregator"][1].astype(jnp.float32)                        # (D2,)
    wh_t = jnp.concatenate([params[n][0].T for n in HEAD_NAMES], axis=1
                           ).astype(jnp.float32)                            # (D2, 71)
    bh = jnp.concatenate([params[n][1] for n in HEAD_NAMES], axis=0
                         ).astype(jnp.float32)                              # (71,)

    # No activation between the two linears -> exact fold (done in f32).
    w_comb = wa_t @ wh_t                    # (D2, 71)
    b_comb = ba @ wh_t + bh                 # (71,)

    D2 = wa_t.shape[0]
    D2p = _round_up(D2, 128)
    w_p = jnp.pad(w_comb, ((0, D2p - D2), (0, OUT_PAD - TOTAL_HEAD))).astype(compute_dtype)
    b_p = jnp.pad(b_comb, (0, OUT_PAD - TOTAL_HEAD)).reshape(1, OUT_PAD).astype(jnp.float32)
    return {"w": w_p, "b": b_p}


def furniture_encoder_head_v2(concat_vector, prepared):
    """Pallas-backed forward pass.

    concat_vector: (B, 2*hidden_dim) float32
    prepared:      output of prepare_weights() (precomputed once)
    Returns the 8-tuple of head logits (float32), matching the PyTorch module.
    """
    w_p, b_p = prepared["w"], prepared["b"]
    compute_dtype = w_p.dtype
    B, D2 = concat_vector.shape
    D2p = w_p.shape[0]
    assert D2 <= D2p

    # --- Generation-aware VMEM budget (v7x: 64 MiB/TC, v5e/v6e: 128 MiB). ---
    try:
        vmem_cap = int(pltpu.get_tpu_info().vmem_capacity_bytes)
    except Exception:
        vmem_cap = 64 << 20                       # conservative fallback (v7x-sized)
    vmem_budget = max(16 << 20, int(0.6 * vmem_cap))

    x_item = jnp.dtype(compute_dtype).itemsize

    def step_bytes(tb):
        # 2x weight/bias blocks (default BlockSpec double-buffering; constant
        # index_map so the DMA happens once but space is reserved)
        # + double-buffered x tile + double-buffered f32 out tile
        # + the f32 matmul result held before the cast/store.
        return (2 * (D2p * OUT_PAD * x_item + OUT_PAD * 4)
                + 2 * tb * D2p * x_item
                + 2 * tb * OUT_PAD * 4
                + tb * OUT_PAD * 4)

    # --- Balanced batch tiling: minimal padding, >=2 grid steps when it helps v7x. ---
    Bp8 = _round_up(B, 8)
    cap = next((tb for tb in (1024, 512, 256, 128, 64, 32, 16, 8)
                if step_bytes(tb) <= vmem_budget), 8)
    grid_n = _cdiv(Bp8, cap)
    if grid_n == 1 and Bp8 >= 16:
        grid_n = 2          # "parallel" then shards the grid across v7x's 2 TensorCores
    TB = _round_up(_cdiv(Bp8, grid_n), 8)         # balanced tile (multiple of 8 sublanes)
    Bp = grid_n * TB                              # waste is < 8 rows beyond round_up(B,8)

    x_p = jnp.pad(concat_vector, ((0, Bp - B), (0, D2p - D2))).astype(compute_dtype)

    vmem_limit = min(max(int(1.25 * step_bytes(TB)) + (2 << 20), 16 << 20),
                     vmem_budget)

    cost = pl.CostEstimate(
        flops=2 * Bp * D2p * OUT_PAD,
        transcendentals=0,
        bytes_accessed=(Bp * D2p * x_item             # x
                        + D2p * OUT_PAD * x_item      # folded weight
                        + OUT_PAD * 4                 # folded bias
                        + Bp * OUT_PAD * 4),          # out
    )

    out = pl.pallas_call(
        _furniture_head_kernel,
        out_shape=jax.ShapeDtypeStruct((Bp, OUT_PAD), jnp.float32),
        grid=(grid_n,),
        in_specs=[
            pl.BlockSpec((TB, D2p), lambda i: (i, 0)),        # x: batch-tiled
            pl.BlockSpec((D2p, OUT_PAD), lambda i: (0, 0)),   # W_comb: resident
            pl.BlockSpec((1, OUT_PAD), lambda i: (0, 0)),     # b_comb: resident
        ],
        out_specs=pl.BlockSpec((TB, OUT_PAD), lambda i: (i, 0)),
        compiler_params=pltpu.CompilerParams(
            dimension_semantics=("parallel",),                # megacore on v7x; no-op v5e/v6e
            vmem_limit_bytes=vmem_limit,
        ),
        cost_estimate=cost,
    )(x_p, w_p, b_p)

    # Split the fused lane-padded (Bp, 128) output back into per-head logits.
    heads = []
    off = 0
    for sz in HEAD_SIZES:
        heads.append(out[:B, off:off + sz])
        off += sz
    return tuple(heads)


def init_params(key, hidden_dim):
    """Deterministic synthetic init with PyTorch nn.Linear shapes / layout."""
    d2 = 2 * hidden_dim
    scale = 1.0 / jnp.sqrt(jnp.float32(d2))
    keys = jax.random.split(key, 2 * (1 + len(HEAD_SIZES)))
    params = {
        "aggregator": (
            jax.random.uniform(keys[0], (d2, d2), jnp.float32, -scale, scale),
            jax.random.uniform(keys[1], (d2,), jnp.float32, -scale, scale),
        )
    }
    for i, (name, sz) in enumerate(zip(HEAD_NAMES, HEAD_SIZES)):
        kw, kb = keys[2 + 2 * i], keys[3 + 2 * i]
        params[name] = (
            jax.random.uniform(kw, (sz, d2), jnp.float32, -scale, scale),
            jax.random.uniform(kb, (sz,), jnp.float32, -scale, scale),
        )
    return params


def reference_forward(concat_vector, params):
    """Pure-JAX reference mirroring the PyTorch forward (per-head linears)."""
    wa, ba = params["aggregator"]
    agg = concat_vector @ wa.T + ba
    outs = []
    for name in HEAD_NAMES:
        w, b = params[name]
        outs.append(agg @ w.T + b)
    return tuple(outs)


if __name__ == "__main__":
    hidden_dim = 32          # -> concat_vector has 2*hidden_dim = 64 features (padded to 128)
    batch = 4                # padded to an 8-row batch tile inside the wrapper

    key = jax.random.PRNGKey(0)
    k_x, k_p = jax.random.split(key)
    concat_vector = jax.random.normal(k_x, (batch, 2 * hidden_dim), jnp.float32)
    params = init_params(k_p, hidden_dim)

    refs = reference_forward(concat_vector, params)

    # f32 compute path: tight numerical check.  The offline fold changes the rounding
    # order vs. the two-step reference, so 1e-4 rather than 1e-5 tolerance.
    prep_f32 = prepare_weights(params, compute_dtype=jnp.float32)
    outs_f32 = jax.block_until_ready(furniture_encoder_head_v2(concat_vector, prep_f32))
    for o, r, sz in zip(outs_f32, refs, HEAD_SIZES):
        assert o.shape == (batch, sz), (o.shape, sz)
        assert jnp.allclose(o, r, atol=1e-4, rtol=1e-4), float(jnp.max(jnp.abs(o - r)))

    # bf16 compute path (default / fast path): prepared ONCE, reused per call; loose check.
    prep = prepare_weights(params)
    outs = jax.block_until_ready(furniture_encoder_head_v2(concat_vector, prep))
    for o, r, sz in zip(outs, refs, HEAD_SIZES):
        assert o.shape == (batch, sz), (o.shape, sz)
        assert jnp.allclose(o, r, atol=5e-2, rtol=5e-2), float(jnp.max(jnp.abs(o - r)))

    print("KERNEL_OK")
</pallas_src>

<mosaic_0001>
module attributes {stable_mosaic.version = 11 : i64} {
  func.func @_furniture_head_kernel(%arg0: i32, %arg1: memref<8x128xf32, #tpu.memory_space<vmem>>, %arg2: memref<128x128xf32, #tpu.memory_space<vmem>>, %arg3: memref<1x128xf32, #tpu.memory_space<vmem>>, %arg4: memref<8x128xf32, #tpu.memory_space<vmem>>) attributes {dimension_semantics = [#tpu.dimension_semantics<parallel>], iteration_bounds = array<i64: 1>, scalar_prefetch = 0 : i64, scratch_operands = 0 : i64, tpu.core_type = #tpu.core_type<tc>, window_params = [{transform_indices = @transform_0, window_bounds = array<i64: 8, 128>}, {pipeline_mode = #tpu.pipeline_mode<synchronous>, transform_indices = @transform_1, window_bounds = array<i64: 128, 128>}, {pipeline_mode = #tpu.pipeline_mode<synchronous>, transform_indices = @transform_2, window_bounds = array<i64: 1, 128>}, {transform_indices = @transform_3, window_bounds = array<i64: 8, 128>}]} {
    %c0 = arith.constant 0 : index
    %c0_0 = arith.constant 0 : index
    %0 = vector.load %arg1[%c0, %c0_0] : memref<8x128xf32, #tpu.memory_space<vmem>>, vector<8x128xf32>
    %c0_1 = arith.constant 0 : index
    %c0_2 = arith.constant 0 : index
    %1 = vector.load %arg2[%c0_1, %c0_2] : memref<128x128xf32, #tpu.memory_space<vmem>>, vector<128x128xf32>
    %cst = arith.constant dense<0.000000e+00> : vector<8x128xf32>
    %2 = tpu.matmul %0, %1, %cst {dimension_numbers = #tpu.dot_dimension_numbers<[1], [0], [0], [1], [0, 0, 1, 1], [], []>} : vector<8x128xf32>, vector<128x128xf32>, vector<8x128xf32> -> vector<8x128xf32>
    %c0_3 = arith.constant 0 : index
    %c0_4 = arith.constant 0 : index
    %3 = vector.load %arg3[%c0_3, %c0_4] : memref<1x128xf32, #tpu.memory_space<vmem>>, vector<1x128xf32>
    %4 = vector.broadcast %3 : vector<1x128xf32> to vector<8x128xf32>
    %5 = arith.addf %2, %4 : vector<8x128xf32>
    %c0_5 = arith.constant 0 : index
    %c0_6 = arith.constant 0 : index
    %6 = vector.load %arg4[%c0_5, %c0_6] : memref<8x128xf32, #tpu.memory_space<vmem>>, vector<8x128xf32>
    tpu.vector_store %arg4[%c0_5, %c0_6], %5 {strides = array<i32>} : memref<8x128xf32, #tpu.memory_space<vmem>>, vector<8x128xf32>,
    return
  }
  func.func @transform_0(%arg0: i32) -> (i32, i32) {
    %c0_i32 = arith.constant 0 : i32
    %c0_i32_0 = arith.constant 0 : i32
    return %arg0, %c0_i32 : i32, i32
  }
  func.func @transform_1(%arg0: i32) -> (i32, i32) {
    %c0_i32 = arith.constant 0 : i32
    %c0_i32_0 = arith.constant 0 : i32
    %c0_i32_1 = arith.constant 0 : i32
    return %c0_i32, %c0_i32_0 : i32, i32
  }
  func.func @transform_2(%arg0: i32) -> (i32, i32) {
    %c0_i32 = arith.constant 0 : i32
    %c0_i32_0 = arith.constant 0 : i32
    %c0_i32_1 = arith.constant 0 : i32
    return %c0_i32, %c0_i32_0 : i32, i32
  }
  func.func @transform_3(%arg0: i32) -> (i32, i32) {
    %c0_i32 = arith.constant 0 : i32
    %c0_i32_0 = arith.constant 0 : i32
    return %arg0, %c0_i32 : i32, i32
  }
}

</mosaic_0001>

<llo_original>
// kernel: tpu_custom_call.1
$region0: #{tpu_custom_call.1}
  #allocation0 [shape = 'u32[]', space=smem, size = 0x4, offset = 0x4, fixed_abs, tag = 'smem constant byte address 0x4 - core index']
  #allocation1 [shape = 'u32[144,128]{1,0:T(1,128)}', space=vmem, size = 0x12000, scoped, tag = 'internal scratch']
  %s0 = inlined_call_operand.hbm [shape: f32[8,128], index: 0, kind: input, shape index: {}]
  %s1 = inlined_call_operand.hbm [shape: f32[128,128], index: 1, kind: input, shape index: {}]
  %s2 = inlined_call_operand.vmem [shape: f32[1,128], index: 2, kind: input, shape index: {}]
  %s3 = inlined_call_operand.hbm [shape: f32[8,128], index: 3, kind: output, shape index: {}]
  %s4 = sld [smem:[#allocation0]]
  $region30: #{tpu_custom_call.1} parent=0
    _
  %s6 = ssub.s32 1, %s4
  %s7 = scalar_select 0, %s6, %s4
  $region1: #{tpu_custom_call.1} parent=0
    #allocation2 [shape = 'u8[4096]{0}', space=vmem, size = 0x1000, scoped, tag = 'input window, operand 0, single buffered']
    #allocation3 [shape = 's32[1]{0}', space=sflag, size = 0x4, scoped, tag = 'scoped memory for tpu_custom_call.1']
    #allocation4 [shape = 's32[1]{0}', space=sflag, size = 0x4, scoped, tag = 'scoped memory for tpu_custom_call.1']
    #allocation5 [shape = 'u8[65536]{0}', space=vmem, size = 0x10000, scoped, tag = 'input window, operand 1, single buffered']
    #allocation6 [shape = 's32[1]{0}', space=sflag, size = 0x4, scoped, tag = 'scoped memory for tpu_custom_call.1']
    #allocation7 [shape = 'u8[4096]{0}', space=vmem, size = 0x1000, scoped, tag = 'output window, operand 0, single buffered']
    %8 = vsyncpa [#allocation3], 0
    %9 = vsyncpa [#allocation6], 0
    %10 = vsyncpa [#allocation4], 0
    // Predicated region
    $region2: #{tpu_custom_call.1} parent=1 // pred_check
      _
    $region3: #{tpu_custom_call.1} parent=1 // pred_check_branch
      %12 = sbr.rel (0) target = $region5
    $region4: #{tpu_custom_call.1} parent=1 // pred_region
      %s14 = ssub.s32 128, 128
      %15 = vsyncadd [#allocation3], %s14
      %s17 = sshll.u32 [#allocation2], 4
      %s18 = int_to_ptr.vmem [resolvable:$true] %s17
      %20 = dma.hbm_to_vmem [thread:$0]  %s0, 128, %s18, [#allocation3]
    $region5: #{tpu_custom_call.1} parent=1 // pred_fallthru
      _
    // Predicated region
    $region6: #{tpu_custom_call.1} parent=1 // pred_check
      _
    $region7: #{tpu_custom_call.1} parent=1 // pred_check_branch
      %22 = sbr.rel (0) target = $region9
    $region8: #{tpu_custom_call.1} parent=1 // pred_region
      %s24 = ssub.s32 2048, 2048
      %25 = vsyncadd [#allocation6], %s24
      %s26 = sshll.u32 [#allocation5], 4
      %s27 = int_to_ptr.vmem [resolvable:$true] %s26
      %32 = dma.hbm_to_vmem [thread:$0]  %s1, 2048, %s27, [#allocation6], 128, 128, 8
    $region9: #{tpu_custom_call.1} parent=1 // pred_fallthru
      _
    // Predicated region
    $region10: #{tpu_custom_call.1} parent=1 // pred_check
      _
    $region11: #{tpu_custom_call.1} parent=1 // pred_check_branch
      %34 = sbr.rel (0) target = $region13
    $region12: #{tpu_custom_call.1} parent=1 // pred_region
      _
    $region13: #{tpu_custom_call.1} parent=1 // pred_fallthru
      _
    // Predicated region
    $region14: #{tpu_custom_call.1} parent=1 // pred_check
      _
    $region15: #{tpu_custom_call.1} parent=1 // pred_check_branch
      %36 = sbr.rel (0) target = $region17
    $region16: #{tpu_custom_call.1} parent=1 // pred_region
      %37 = dma.done [#allocation3], 128
    $region17: #{tpu_custom_call.1} parent=1 // pred_fallthru
      _
    // Predicated region
    $region18: #{tpu_custom_call.1} parent=1 // pred_check
      _
    $region19: #{tpu_custom_call.1} parent=1 // pred_check_branch
      %39 = sbr.rel (0) target = $region21
    $region20: #{tpu_custom_call.1} parent=1 // pred_region
      %40 = dma.done [#allocation6], 2048
    $region21: #{tpu_custom_call.1} parent=1 // pred_fallthru
      _
    %v41 = vld [vmem:[#allocation2] sm:$0xff]
    %v42 = vld [vmem:[#allocation5] sm:$0xff]
    %v43 = vld [vmem:[#allocation5 + $0x8] sm:$0xff]
    %v44 = vld [vmem:[#allocation5 + $0x10] sm:$0xff]
    %v45 = vld [vmem:[#allocation5 + $0x18] sm:$0xff]
    %v46 = vld [vmem:[#allocation5 + $0x20] sm:$0xff]
    %v47 = vld [vmem:[#allocation5 + $0x28] sm:$0xff]
    %v48 = vld [vmem:[#allocation5 + $0x30] sm:$0xff]
    %v49 = vld [vmem:[#allocation5 + $0x38] sm:$0xff]
    %v50 = vld [vmem:[#allocation5 + $0x40] sm:$0xff]
    %v51 = vld [vmem:[#allocation5 + $0x48] sm:$0xff]
    %v52 = vld [vmem:[#allocation5 + $0x50] sm:$0xff]
    %v53 = vld [vmem:[#allocation5 + $0x58] sm:$0xff]
    %v54 = vld [vmem:[#allocation5 + $0x60] sm:$0xff]
    %v55 = vld [vmem:[#allocation5 + $0x68] sm:$0xff]
    %v56 = vld [vmem:[#allocation5 + $0x70] sm:$0xff]
    %v57 = vld [vmem:[#allocation5 + $0x78] sm:$0xff]
    %v58 = vld [vmem:[%s2] sm:$0x1]
    %v60 = vlaneseq
    %v61 = vshrl.u32 %v60, 7
    %v62 = vsub.s32 0, %v61
    %v63 = vrot.slane %v58, %v62
    %65 = vmatprep.subr.mxu0 0.0
    %66 = vmatpush1.msra.mxu0 %v57
    %67 = vmatprep.subr.mxu0 0.0
    %68 = vmatpush1.msra.mxu0 %v56
    %69 = vmatprep.subr.mxu0 0.0
    %70 = vmatpush1.msra.mxu0 %v55
    %71 = vmatprep.subr.mxu0 0.0
    %72 = vmatpush1.msra.mxu0 %v54
    %73 = vmatprep.subr.mxu0 0.0
    %74 = vmatpush1.msra.mxu0 %v53
    %75 = vmatprep.subr.mxu0 0.0
    %76 = vmatpush1.msra.mxu0 %v52
    %77 = vmatprep.subr.mxu0 0.0
    %78 = vmatpush1.msra.mxu0 %v51
    %79 = vmatprep.subr.mxu0 0.0
    %80 = vmatpush1.msra.mxu0 %v50
    %81 = vmatprep.subr.mxu0 0.0
    %82 = vmatpush1.msra.mxu0 %v49
    %83 = vmatprep.subr.mxu0 0.0
    %84 = vmatpush1.msra.mxu0 %v48
    %85 = vmatprep.subr.mxu0 0.0
    %86 = vmatpush1.msra.mxu0 %v47
    %87 = vmatprep.subr.mxu0 0.0
    %88 = vmatpush1.msra.mxu0 %v46
    %89 = vmatprep.subr.mxu0 0.0
    %90 = vmatpush1.msra.mxu0 %v45
    %91 = vmatprep.subr.mxu0 0.0
    %92 = vmatpush1.msra.mxu0 %v44
    %93 = vmatprep.subr.mxu0 0.0
    %94 = vmatpush1.msra.mxu0 %v43
    %95 = vmatprep.subr.mxu0 0.0
    %96 = vmatpush1.msra.mxu0 %v42
    %97 = vmatprep.subr.mxu0 0.0
    %98 = vmatpush2.msra.mxu0 0.0
    %99 = vmatprep.subr.mxu0 0.0
    %100 = vmatpush2.msra.mxu0 0.0
    %101 = vmatprep.subr.mxu0 0.0
    %102 = vmatpush2.msra.mxu0 0.0
    %103 = vmatprep.subr.mxu0 0.0
    %104 = vmatpush2.msra.mxu0 0.0
    %105 = vmatprep.subr.mxu0 0.0
    %106 = vmatpush2.msra.mxu0 0.0
    %107 = vmatprep.subr.mxu0 0.0
    %108 = vmatpush2.msra.mxu0 0.0
    %109 = vmatprep.subr.mxu0 0.0
    %110 = vmatpush2.msra.mxu0 0.0
    %111 = vmatprep.subr.mxu0 0.0
    %112 = vmatpush2.msra.mxu0 0.0
    %113 = vmatprep.subr.mxu0 0.0
    %114 = vmatpush2.msra.mxu0 0.0
    %115 = vmatprep.subr.mxu0 0.0
    %116 = vmatpush2.msra.mxu0 0.0
    %117 = vmatprep.subr.mxu0 0.0
    %118 = vmatpush2.msra.mxu0 0.0
    %119 = vmatprep.subr.mxu0 0.0
    %120 = vmatpush2.msra.mxu0 0.0
    %121 = vmatprep.subr.mxu0 0.0
    %122 = vmatpush2.msra.mxu0 0.0
    %123 = vmatprep.subr.mxu0 0.0
    %124 = vmatpush2.msra.mxu0 0.0
    %125 = vmatprep.subr.mxu0 0.0
    %126 = vmatpush2.msra.mxu0 0.0
    %127 = vmatprep.subr.mxu0 0.0
    %128 = vmatpush2.msra.mxu0 0.0
    %129 = vmatprep.mubr.f32.mxu0 0.0
    %130 = vmatmul.mubr.f32.gmra.mxu0 %v41
    %v131 = vpop.f32.mrf.mxu0
    %v132 = vadd.f32 %v63, %v131
    %v133 = vpop.f32.mrf.mxu0
    %134 = vdwg.mxu0
    %135 = vst [vmem:[#allocation7] sm:$0xff] %v132
    // Predicated region
    $region22: #{tpu_custom_call.1} parent=1 // pred_check
      _
    $region23: #{tpu_custom_call.1} parent=1 // pred_check_branch
      %137 = sbr.rel (0) target = $region25
    $region24: #{tpu_custom_call.1} parent=1 // pred_region
      %s139 = ssub.s32 128, 128
      %140 = vsyncadd [#allocation4], %s139
      %s142 = sshll.u32 [#allocation7], 4
      %s143 = int_to_ptr.vmem [resolvable:$true] %s142
      %145 = dma.vmem_to_hbm [thread:$0]  %s143, 128, %s3, [#allocation4]
    $region25: #{tpu_custom_call.1} parent=1 // pred_fallthru
      _
    // Predicated region
    $region26: #{tpu_custom_call.1} parent=1 // pred_check
      _
    $region27: #{tpu_custom_call.1} parent=1 // pred_check_branch
      %147 = sbr.rel (0) target = $region29
    $region28: #{tpu_custom_call.1} parent=1 // pred_region
      %148 = dma.done [#allocation4], 128
    $region29: #{tpu_custom_call.1} parent=1 // pred_fallthru
      _
    %149 = vsyncpa [#allocation3], 1
    %150 = vsyncpa [#allocation6], 1
    %151 = vsyncpa [#allocation4], 1

</llo_original>
